<compile_context>
chip_gen: v7x
topology: tpu7x:2x2x1
jax: 0.10.0
libtpu: 0.0.40
codegen_flags: <defaults>
</compile_context>

<pallas_src>
import jax
import jax.numpy as jnp
from jax import lax
from jax.experimental import pallas as pl
from jax.experimental.pallas import tpu as pltpu

LANE = 128                      # lane width of the 2-D view
_FAST_PATH_BYTES = 512 * 1024   # per-input native bytes: below this, single block
_TINY_RAGGED_ELEMS = 32 * 1024  # ragged totals up to this run as one (1, total) block
_TARGET_TILE_BYTES = 8 << 20    # per-input per-block HBM tile (native dtype)
_CHUNK_ROWS = 512               # in-kernel rows per inner step (bounds temporaries)


def _round_up(x: int, m: int) -> int:
    return ((x + m - 1) // m) * m


def _tpu_hw():
    """Best-effort (vmem_capacity_bytes, num_tensorcores); safe defaults on failure."""
    vmem = None
    cores = None
    try:
        info = pltpu.get_tpu_info()
        v = getattr(info, "vmem_capacity_bytes", None)
        if isinstance(v, int) and v > 0:
            vmem = v
        for name in ("num_tensorcores", "tensorcores_per_chip", "num_cores",
                     "core_count"):
            c = getattr(info, name, None)
            if isinstance(c, int) and c > 0:
                cores = c
                break
    except Exception:
        pass
    try:
        kind = jax.devices()[0].device_kind.lower()
    except Exception:
        kind = ""
    if vmem is None:
        vmem = (64 << 20) if "7" in kind else (128 << 20)   # v7x: 64 MiB per TC
    if cores is None:
        cores = 2 if any(t in kind for t in ("v4", "v5p", "7")) else 1
    return vmem, cores


def _cost(total: int, itemsize: int) -> pl.CostEstimate:
    return pl.CostEstimate(flops=2 * total, transcendentals=total,
                           bytes_accessed=2 * total * itemsize + 4)


# --------------------------- small-input fast path ---------------------------

def _single_block_kernel(out_ref, lab_ref, loss_ref):
    x = out_ref[...].astype(jnp.float32)
    y = lab_ref[...].astype(jnp.float32)
    loss_ref[0, 0] = -jnp.sum(jnp.log(x) * y)


def _single_block_loss(out2d, lab2d):
    total = int(out2d.size)
    return pl.pallas_call(
        _single_block_kernel,
        out_shape=jax.ShapeDtypeStruct((1, 1), jnp.float32),
        grid=(1,),
        in_specs=[pl.BlockSpec(out2d.shape, lambda i: (0, 0)),
                  pl.BlockSpec(lab2d.shape, lambda i: (0, 0))],
        out_specs=pl.BlockSpec((1, 1), lambda i: (0, 0),
                               memory_space=pltpu.SMEM),
        cost_estimate=_cost(total, out2d.dtype.itemsize),
    )(out2d, lab2d)


# --------------------------- streaming (tiled) path ---------------------------

def _make_tiled_kernel(tile_r, chunk_r, rows_valid, tiles_per_split, n_tiles,
                       need_row_mask, need_tile_guard):
    n_chunks = tile_r // chunk_r

    def kernel(out_ref, lab_ref, loss_ref, acc_ref):
        s = pl.program_id(0)
        g = pl.program_id(1)

        @pl.when(g == 0)
        def _init():
            acc_ref[...] = jnp.zeros_like(acc_ref)

        tile_idx = s * tiles_per_split + g

        def accumulate():
            row0 = tile_idx * tile_r
            if need_row_mask:
                base = lax.broadcasted_iota(jnp.int32, (chunk_r, LANE), 0)

            def body(c, carry):
                r = c * chunk_r
                if not isinstance(r, int):
                    r = pl.multiple_of(r, chunk_r)
                # Cast after the VMEM load (free on VPU; HBM traffic stays native dtype).
                x = out_ref[pl.ds(r, chunk_r), :].astype(jnp.float32)
                y = lab_ref[pl.ds(r, chunk_r), :].astype(jnp.float32)
                if need_row_mask:
                    # Mask rows past the valid data BEFORE the log so garbage in the
                    # (un-DMA'd) tail of the last tile cannot produce NaN/Inf.
                    valid = base < (rows_valid - row0 - r)
                    x = jnp.where(valid, x, 1.0)   # log(1) * 0 == 0
                    y = jnp.where(valid, y, 0.0)
                prod = jnp.log(x) * y              # EUP log + VPU mul, hidden under DMA
                # Fold into the (8, LANE) vreg-shaped accumulator with VPU adds only;
                # the cross-lane XLU reduce is deferred to the final grid step.
                acc_ref[...] += prod.reshape(chunk_r // 8, 8, LANE).sum(axis=0)
                return carry

            if n_chunks == 1:
                body(0, 0)
            else:
                lax.fori_loop(0, n_chunks, body, 0)

        if need_tile_guard:
            pl.when(tile_idx < n_tiles)(accumulate)   # skip clamped duplicate tiles
        else:
            accumulate()

        @pl.when(g == pl.num_programs(1) - 1)
        def _finalize():
            loss_ref[0, 0] = -jnp.sum(acc_ref[...])

    return kernel


def my_loss(output: jax.Array, label: jax.Array, *,
            _fast_path_bytes=None, _tile_bytes=None, _n_split=None) -> jax.Array:
    """Pallas equivalent of MyLoss.forward. Returns a (1, 1) float32 array."""
    assert output.shape == label.shape, (output.shape, label.shape)
    itemsize = output.dtype.itemsize
    fast_path_bytes = _FAST_PATH_BYTES if _fast_path_bytes is None else _fast_path_bytes
    tile_bytes = _TARGET_TILE_BYTES if _tile_bytes is None else _tile_bytes

    out_flat = output.reshape(-1)     # free bitcast for contiguous inputs
    lab_flat = label.reshape(-1)
    total = int(out_flat.size)

    if total % LANE != 0:
        if total <= _TINY_RAGGED_ELEMS:
            # Tiny ragged input: one (1, total) block, no padding, no copy.
            return _single_block_loss(out_flat.reshape(1, -1),
                                      lab_flat.reshape(1, -1))
        # Rare large ragged input: minimal pad to the next lane multiple so the
        # 2-D view exists (output=1 / label=0 contributes exactly 0).
        pad = LANE - total % LANE
        out_flat = jnp.pad(out_flat, (0, pad), constant_values=1)
        lab_flat = jnp.pad(lab_flat, (0, pad), constant_values=0)

    rows = int(out_flat.size) // LANE
    out2d = out_flat.reshape(rows, LANE)
    lab2d = lab_flat.reshape(rows, LANE)

    if rows * LANE * itemsize <= fast_path_bytes:
        # Small input (typical for this module): single block, zero pipeline overhead.
        return _single_block_loss(out2d, lab2d)

    # ---------------- pipelined HBM-bound streaming reduction ----------------
    vmem_cap, num_tc = _tpu_hw()
    # Per-generation scoped-VMEM limit, leaving headroom for compiler scratch.
    vmem_limit = (48 << 20) if vmem_cap <= (64 << 20) else (64 << 20)

    # Per-input per-block tile sized by BYTES of the native dtype (~8 MiB),
    # capped so 2 inputs x 2 pipeline buffers + scratch stay under vmem_limit.
    tile_bytes = min(tile_bytes, (vmem_limit - (8 << 20)) // 4)
    target_rows = max(8, _round_up(tile_bytes // (LANE * itemsize), 8))
    chunk_r = min(_CHUNK_ROWS, target_rows)
    tile_r = min(_round_up(target_rows, chunk_r), _round_up(rows, chunk_r))
    n_tiles = pl.cdiv(rows, tile_r)

    # Split the tile range across TensorCores (2 on v7x / v4 / v5p, 1 on v5e/v6e).
    # TODO(synk): if xprof shows only one v7x TC streaming, switch this axis to
    # pltpu.CORE_PARALLEL (or an explicit pl.core_map over a tensorcore mesh).
    if _n_split is not None:
        n_split = max(1, int(_n_split))
    else:
        n_split = max(1, min(num_tc, n_tiles))
    tiles_per_split = pl.cdiv(n_tiles, n_split)

    need_row_mask = (n_tiles * tile_r != rows)
    need_tile_guard = (n_split * tiles_per_split != n_tiles)

    def in_map(s, g):
        t = s * tiles_per_split + g
        if need_tile_guard:
            t = jnp.minimum(t, n_tiles - 1)   # clamp; kernel skips the duplicate tile
        return (t, 0)

    kernel = _make_tiled_kernel(tile_r, chunk_r, rows, tiles_per_split, n_tiles,
                                need_row_mask, need_tile_guard)

    partials = pl.pallas_call(
        kernel,
        out_shape=jax.ShapeDtypeStruct((n_split, 1), jnp.float32),
        grid_spec=pltpu.PrefetchScalarGridSpec(
            num_scalar_prefetch=0,
            grid=(n_split, tiles_per_split),
            in_specs=[pl.BlockSpec((tile_r, LANE), in_map),
                      pl.BlockSpec((tile_r, LANE), in_map)],
            out_specs=pl.BlockSpec((1, 1), lambda s, g: (s, 0),
                                   memory_space=pltpu.SMEM),
            scratch_shapes=[pltpu.VMEM((8, LANE), jnp.float32)],
        ),
        compiler_params=pltpu.CompilerParams(
            dimension_semantics=("parallel", "arbitrary"),
            vmem_limit_bytes=vmem_limit,
        ),
        cost_estimate=_cost(total, itemsize),
    )(out2d, lab2d)

    if n_split == 1:
        return partials                      # already (1, 1) and already negated
    return jnp.sum(partials).reshape(1, 1)   # tiny add of the per-core partials


if __name__ == "__main__":
    key = jax.random.PRNGKey(0)
    k1, k2, k3, k4, k5, k6, k7, k8 = jax.random.split(key, 8)

    def ref_loss(o, l):
        return -jnp.sum(jnp.log(o.astype(jnp.float32)) *
                        l.astype(jnp.float32)).reshape(1, 1)

    # Case 1: typical tiny use, (4, 128) f32 probability rows -> fast path.
    o1 = jax.nn.softmax(jax.random.normal(k1, (4, 128), jnp.float32), axis=-1)
    l1 = jax.nn.softmax(jax.random.normal(k2, (4, 128), jnp.float32), axis=-1)
    r1 = jax.block_until_ready(my_loss(o1, l1))
    assert r1.shape == (1, 1)
    assert jnp.allclose(r1, ref_loss(o1, l1), rtol=1e-5, atol=1e-5), (r1, ref_loss(o1, l1))

    # Case 2: ragged bf16 (3, 100) -> tiny (1, 300) single-block path, no padding.
    o2 = jax.nn.softmax(jax.random.normal(k3, (3, 100), jnp.float32),
                        axis=-1).astype(jnp.bfloat16)
    l2 = jax.nn.softmax(jax.random.normal(k4, (3, 100), jnp.float32),
                        axis=-1).astype(jnp.bfloat16)
    r2 = jax.block_until_ready(my_loss(o2, l2))
    assert jnp.allclose(r2, ref_loss(o2, l2), rtol=1e-3, atol=1e-3), (r2, ref_loss(o2, l2))

    # Case 3: large enough to take the tiled streaming path with default sizing
    # (exercises the in-kernel chunked fori_loop accumulation).
    o3 = jax.nn.softmax(jax.random.normal(k5, (2048, 128), jnp.float32), axis=-1)
    l3 = jax.nn.softmax(jax.random.normal(k6, (2048, 128), jnp.float32), axis=-1)
    r3 = jax.block_until_ready(my_loss(o3, l3))
    assert jnp.allclose(r3, ref_loss(o3, l3), rtol=1e-4, atol=1e-4), (r3, ref_loss(o3, l3))

    # Case 4: forced tiny tiles + 2-way split on (257, 128) to exercise the
    # partial-tile row mask, index-map clamp and pl.when tile skip on any chip.
    o4 = jax.nn.softmax(jax.random.normal(k7, (257, 128), jnp.float32), axis=-1)
    l4 = jax.nn.softmax(jax.random.normal(k8, (257, 128), jnp.float32), axis=-1)
    r4 = jax.block_until_ready(my_loss(o4, l4, _fast_path_bytes=0,
                                       _tile_bytes=64 * 1024, _n_split=2))
    assert jnp.allclose(r4, ref_loss(o4, l4), rtol=1e-4, atol=1e-4), (r4, ref_loss(o4, l4))

    print("KERNEL_OK")
</pallas_src>

<mosaic_0001>
module attributes {stable_mosaic.version = 11 : i64} {
  func.func @_single_block_kernel(%arg0: i32, %arg1: memref<4x128xf32, #tpu.memory_space<vmem>>, %arg2: memref<4x128xf32, #tpu.memory_space<vmem>>, %arg3: memref<1x1xf32, #tpu.memory_space<smem>>) attributes {dimension_semantics = [#tpu.dimension_semantics<arbitrary>], iteration_bounds = array<i64: 1>, scalar_prefetch = 0 : i64, scratch_operands = 0 : i64, tpu.core_type = #tpu.core_type<tc>, window_params = [{pipeline_mode = #tpu.pipeline_mode<synchronous>, transform_indices = @transform_0, window_bounds = array<i64: 4, 128>}, {pipeline_mode = #tpu.pipeline_mode<synchronous>, transform_indices = @transform_1, window_bounds = array<i64: 4, 128>}, {transform_indices = @transform_2, window_bounds = array<i64: 1, 1>}]} {
    %c0 = arith.constant 0 : index
    %c0_0 = arith.constant 0 : index
    %0 = vector.load %arg1[%c0, %c0_0] : memref<4x128xf32, #tpu.memory_space<vmem>>, vector<4x128xf32>
    %c0_1 = arith.constant 0 : index
    %c0_2 = arith.constant 0 : index
    %1 = vector.load %arg2[%c0_1, %c0_2] : memref<4x128xf32, #tpu.memory_space<vmem>>, vector<4x128xf32>
    %2 = math.log %0 : vector<4x128xf32>
    %3 = arith.mulf %2, %1 : vector<4x128xf32>
    %4 = vector.shape_cast %3 : vector<4x128xf32> to vector<1x4x128xf32>
    %cst = arith.constant dense<0.000000e+00> : vector<1xf32>
    %5 = vector.multi_reduction <add>, %4, %cst [1, 2] : vector<1x4x128xf32> to vector<1xf32>
    %6 = vector.shape_cast %5 : vector<1xf32> to vector<1x1x1xf32>
    %7 = vector.extract %6[0, 0, 0] : f32 from vector<1x1x1xf32>
    %cst_3 = arith.constant 0.000000e+00 : f32
    %8 = arith.subf %cst_3, %7 : f32
    %c0_4 = arith.constant 0 : index
    %c0_5 = arith.constant 0 : index
    %9 = memref.load %arg3[%c0_4, %c0_5] : memref<1x1xf32, #tpu.memory_space<smem>>
    memref.store %8, %arg3[%c0_4, %c0_5] : memref<1x1xf32, #tpu.memory_space<smem>>
    return
  }
  func.func @transform_0(%arg0: i32) -> (i32, i32) {
    %c0_i32 = arith.constant 0 : i32
    %c0_i32_0 = arith.constant 0 : i32
    %c0_i32_1 = arith.constant 0 : i32
    return %c0_i32, %c0_i32_0 : i32, i32
  }
  func.func @transform_1(%arg0: i32) -> (i32, i32) {
    %c0_i32 = arith.constant 0 : i32
    %c0_i32_0 = arith.constant 0 : i32
    %c0_i32_1 = arith.constant 0 : i32
    return %c0_i32, %c0_i32_0 : i32, i32
  }
  func.func @transform_2(%arg0: i32) -> (i32, i32) {
    %c0_i32 = arith.constant 0 : i32
    %c0_i32_0 = arith.constant 0 : i32
    %c0_i32_1 = arith.constant 0 : i32
    return %c0_i32, %c0_i32_0 : i32, i32
  }
}

</mosaic_0001>

<llo_original>
// kernel: tpu_custom_call.1
$region0: #{tpu_custom_call.1}
  #allocation0 [shape = 'u32[]', space=smem, size = 0x4, offset = 0x4, fixed_abs, tag = 'smem constant byte address 0x4 - core index']
  #allocation1 [shape = 'u32[144,128]{1,0:T(1,128)}', space=vmem, size = 0x12000, scoped, tag = 'internal scratch']
  %s0 = inlined_call_operand.hbm [shape: f32[4,128], index: 0, kind: input, shape index: {}]
  %s1 = inlined_call_operand.hbm [shape: f32[4,128], index: 1, kind: input, shape index: {}]
  %s2 = inlined_call_operand.hbm [shape: f32[1,1], index: 2, kind: output, shape index: {}]
  %s3 = sld [smem:[#allocation0]]
  $region26: #{tpu_custom_call.1} parent=0
    _
  %s5 = ssub.s32 1, %s3
  %s6 = scalar_select 0, %s5, %s3
  $region1: #{tpu_custom_call.1} parent=0
    #allocation2 [shape = 'u8[2048]{0}', space=vmem, size = 0x800, scoped, tag = 'input window, operand 0, single buffered']
    #allocation3 [shape = 's32[1]{0}', space=sflag, size = 0x4, scoped, tag = 'scoped memory for tpu_custom_call.1']
    #allocation4 [shape = 's32[1]{0}', space=sflag, size = 0x4, scoped, tag = 'scoped memory for tpu_custom_call.1']
    #allocation5 [shape = 'u8[2048]{0}', space=vmem, size = 0x800, scoped, tag = 'input window, operand 1, single buffered']
    #allocation6 [shape = 's32[1]{0}', space=sflag, size = 0x4, scoped, tag = 'scoped memory for tpu_custom_call.1']
    #allocation7 [shape = 'u8[512]{0}', space=smem, size = 0x200, scoped, tag = 'output window, operand 0, single buffered']
    %7 = vsyncpa [#allocation3], 0
    %8 = vsyncpa [#allocation6], 0
    %9 = vsyncpa [#allocation4], 0
    // Predicated region
    $region2: #{tpu_custom_call.1} parent=1 // pred_check
      _
    $region3: #{tpu_custom_call.1} parent=1 // pred_check_branch
      %11 = sbr.rel (0) target = $region5
    $region4: #{tpu_custom_call.1} parent=1 // pred_region
      %s13 = ssub.s32 64, 64
      %14 = vsyncadd [#allocation3], %s13
      %s16 = sshll.u32 [#allocation2], 4
      %s17 = int_to_ptr.vmem [resolvable:$true] %s16
      %19 = dma.hbm_to_vmem [thread:$0]  %s0, 64, %s17, [#allocation3]
    $region5: #{tpu_custom_call.1} parent=1 // pred_fallthru
      _
    // Predicated region
    $region6: #{tpu_custom_call.1} parent=1 // pred_check
      _
    $region7: #{tpu_custom_call.1} parent=1 // pred_check_branch
      %21 = sbr.rel (0) target = $region9
    $region8: #{tpu_custom_call.1} parent=1 // pred_region
      %s23 = ssub.s32 64, 64
      %24 = vsyncadd [#allocation6], %s23
      %s26 = sshll.u32 [#allocation5], 4
      %s27 = int_to_ptr.vmem [resolvable:$true] %s26
      %29 = dma.hbm_to_vmem [thread:$0]  %s1, 64, %s27, [#allocation6]
    $region9: #{tpu_custom_call.1} parent=1 // pred_fallthru
      _
    // Predicated region
    $region10: #{tpu_custom_call.1} parent=1 // pred_check
      _
    $region11: #{tpu_custom_call.1} parent=1 // pred_check_branch
      %31 = sbr.rel (0) target = $region13
    $region12: #{tpu_custom_call.1} parent=1 // pred_region
      %32 = dma.done [#allocation3], 64
    $region13: #{tpu_custom_call.1} parent=1 // pred_fallthru
      _
    // Predicated region
    $region14: #{tpu_custom_call.1} parent=1 // pred_check
      _
    $region15: #{tpu_custom_call.1} parent=1 // pred_check_branch
      %34 = sbr.rel (0) target = $region17
    $region16: #{tpu_custom_call.1} parent=1 // pred_region
      %35 = dma.done [#allocation6], 64
    $region17: #{tpu_custom_call.1} parent=1 // pred_fallthru
      _
    %v36 = vld [vmem:[#allocation2] sm:$0xf]
    %v37 = vld [vmem:[#allocation5] sm:$0xf]
    %v38 = vlog2.pop %v36
    %v39 = vmul.f32 %v38, 0.6931472
    %v40 = vmul.f32 %v39, %v37
    %vm41 = vcmask 1043456
    %v42 = vsel %vm41, %v40, 0.0
    %43 = vadd.xlane.f32.xlu0 %v42
    %v44 = vpop.xlane.xlu0 %43
    %v45 = vrot.slane %v44, 4
    %v46 = vadd.f32 %v44, %v45
    %v47 = vrot.slane %v46, 2
    %v48 = vadd.f32 %v46, %v47
    %v49 = vrot.slane %v48, 1
    %v50 = vadd.f32 %v48, %v49
    %s51 = vtos %v50
    %s52 = ssub.f32 0.0, %s51
    %s53 = scalar_lea.smem [#allocation7], 0
    %54 = sst [smem:[%s53]] %s52
    // Predicated region
    $region18: #{tpu_custom_call.1} parent=1 // pred_check
      _
    $region19: #{tpu_custom_call.1} parent=1 // pred_check_branch
      %56 = sbr.rel (0) target = $region21
    $region20: #{tpu_custom_call.1} parent=1 // pred_region
      %s58 = ssub.s32 16, 16
      %59 = vsyncadd [#allocation4], %s58
      %62 = dma.smem_to_hbm [#allocation7], 16, %s2, [#allocation4]
    $region21: #{tpu_custom_call.1} parent=1 // pred_fallthru
      _
    // Predicated region
    $region22: #{tpu_custom_call.1} parent=1 // pred_check
      _
    $region23: #{tpu_custom_call.1} parent=1 // pred_check_branch
      %64 = sbr.rel (0) target = $region25
    $region24: #{tpu_custom_call.1} parent=1 // pred_region
      %65 = dma.done [#allocation4], 16
    $region25: #{tpu_custom_call.1} parent=1 // pred_fallthru
      _
    %66 = sfence
    %67 = vsyncpa [#allocation3], 1
    %68 = vsyncpa [#allocation6], 1
    %69 = vsyncpa [#allocation4], 1

</llo_original>
